<compile_context>
chip_gen: v7x
topology: tpu7x:2x2x1
jax: 0.10.0
libtpu: 0.0.40
codegen_flags: <defaults>
</compile_context>

<pallas_src>
import jax
import jax.numpy as jnp
from jax.experimental import pallas as pl
from jax.experimental.pallas import tpu as pltpu


def _mlp_kernel(x_ref, w1_ref, b1_ref, w2_ref, b2_ref, o_ref):
    # Layer 1 on the MXU: (TB, F) @ (F, HP) with f32 accumulation; bias + ReLU
    # on the VPU in f32.
    h = jnp.dot(x_ref[...], w1_ref[...], preferred_element_type=jnp.float32)
    h = jnp.maximum(h + b1_ref[...], 0.0)

    # Layer 2 on VPU + XLU: multiply by the (1, HP) w2 row and cross-lane
    # reduce. Avoids an N=1 matmul that would use 1/128..1/256 of the MXU.
    y = jnp.sum(h * w2_ref[...], axis=-1, keepdims=True) + b2_ref[0, 0]
    y = jnp.maximum(y, 0.0)

    # Lane-dense store: broadcast the per-row scalar across 128 lanes so the
    # writeback is an unmasked full-lane store (wrapper slices to (B, 1)).
    o_ref[...] = jnp.broadcast_to(y, o_ref.shape).astype(o_ref.dtype)


def regression_net_forward(x, w1_t, b1, w2_t, b2, *,
                           compute_dtype=jnp.float32, batch_tile=256):
    """Forward pass of RegressionNet.

    x:    (B, F) float32
    w1_t: (F, H) float32  (fc1 weight, transposed)
    b1:   (1, H) float32
    w2_t: (H, 1) float32  (fc2 weight, transposed)
    b2:   (1, 1) float32
    Returns (B, 1) float32.
    """
    B, F = x.shape
    H = w1_t.shape[1]

    # --- Pad hidden dim to a multiple of 128 (500 -> 512). Zero padding is
    # numerically exact: padded h columns are relu(0 + 0) = 0 and the padded
    # w2 entries are 0, so they contribute nothing to the reduction.
    HP = ((H + 127) // 128) * 128
    if HP != H:
        w1_t = jnp.pad(w1_t, ((0, 0), (0, HP - H)))
        b1 = jnp.pad(b1, ((0, 0), (0, HP - H)))
        w2_t = jnp.pad(w2_t, ((0, HP - H), (0, 0)))
    w2_row = w2_t.T.reshape(1, HP)  # (1, HP) row for the VPU/XLU layer-2 path

    # --- Pad batch to a multiple of the batch tile (tile itself a multiple of
    # the 8-row f32 sublane tile). Padded rows are sliced off at the end.
    B8 = ((B + 7) // 8) * 8
    TB = min(batch_tile, B8)
    B_pad = ((B8 + TB - 1) // TB) * TB
    if B_pad != B:
        x = jnp.pad(x, ((0, B_pad - B), (0, 0)))

    # Matmul operands may be bf16 (v6e/v7x MXU native, halves w1/x DMA bytes);
    # accumulate + bias + ReLU stay f32.
    xq = x.astype(compute_dtype)
    w1q = w1_t.astype(compute_dtype)
    b1f = b1.astype(jnp.float32)
    w2f = w2_row.astype(jnp.float32)
    b2f = b2.reshape(1, 1).astype(jnp.float32)

    out = pl.pallas_call(
        _mlp_kernel,
        out_shape=jax.ShapeDtypeStruct((B_pad, 128), jnp.float32),
        grid_spec=pltpu.PrefetchScalarGridSpec(
            num_scalar_prefetch=0,
            grid=(B_pad // TB,),
            in_specs=[
                # x tile: pipelined along the batch grid axis.
                pl.BlockSpec((TB, F), lambda i: (i, 0)),
                # Weights / biases: constant index_map -> VMEM-resident.
                pl.BlockSpec((F, HP), lambda i: (0, 0)),
                pl.BlockSpec((1, HP), lambda i: (0, 0)),
                pl.BlockSpec((1, HP), lambda i: (0, 0)),
                # b2 is a single scalar: keep it in SMEM, no VMEM tile / DMA.
                pl.BlockSpec((1, 1), lambda i: (0, 0),
                             memory_space=pltpu.MemorySpace.SMEM),
            ],
            # Lane-dense (TB, 128) output block -> unmasked full-lane stores.
            out_specs=pl.BlockSpec((TB, 128), lambda i: (i, 0)),
        ),
        compiler_params=pltpu.CompilerParams(
            dimension_semantics=("parallel",)),
    )(xq, w1q, b1f, w2f, b2f)

    return out[:B, :1]


def init_params(key, num_features, hidden=500):
    """PyTorch nn.Linear default init: U[-1/sqrt(fan_in), 1/sqrt(fan_in)]."""
    k1, k2, k3, k4 = jax.random.split(key, 4)
    bound1 = 1.0 / (num_features ** 0.5)
    bound2 = 1.0 / (hidden ** 0.5)
    w1_t = jax.random.uniform(k1, (num_features, hidden), jnp.float32,
                              minval=-bound1, maxval=bound1)
    b1 = jax.random.uniform(k2, (1, hidden), jnp.float32,
                            minval=-bound1, maxval=bound1)
    w2_t = jax.random.uniform(k3, (hidden, 1), jnp.float32,
                              minval=-bound2, maxval=bound2)
    b2 = jax.random.uniform(k4, (1, 1), jnp.float32,
                            minval=-bound2, maxval=bound2)
    return w1_t, b1, w2_t, b2


def _reference(x, w1_t, b1, w2_t, b2):
    return jnp.maximum(jnp.maximum(x @ w1_t + b1, 0.0) @ w2_t + b2, 0.0)


if __name__ == "__main__":
    key = jax.random.PRNGKey(0)
    kx, kp = jax.random.split(key)

    # Small shapes; batch deliberately not a multiple of 8 to exercise padding.
    batch, num_features = 10, 32
    x = jax.random.normal(kx, (batch, num_features), jnp.float32)
    w1_t, b1, w2_t, b2 = init_params(kp, num_features)

    # f32 path: bit-for-bit comparable with the pure-JAX / PyTorch math.
    out = regression_net_forward(x, w1_t, b1, w2_t, b2)
    out = jax.block_until_ready(out)
    ref = _reference(x, w1_t, b1, w2_t, b2)
    assert out.shape == (batch, 1)
    assert jnp.allclose(out, ref, atol=1e-5, rtol=1e-5), "f32 mismatch"

    # bf16 matmul path (v6e / v7x win): compare against a reference computed
    # with identically quantized matmul inputs, so only accumulation-order
    # differences remain.
    out_bf16 = regression_net_forward(x, w1_t, b1, w2_t, b2,
                                      compute_dtype=jnp.bfloat16)
    out_bf16 = jax.block_until_ready(out_bf16)
    ref_bf16 = _reference(x.astype(jnp.bfloat16).astype(jnp.float32),
                          w1_t.astype(jnp.bfloat16).astype(jnp.float32),
                          b1, w2_t, b2)
    assert jnp.allclose(out_bf16, ref_bf16, atol=1e-3, rtol=1e-3), "bf16 mismatch"

    print("KERNEL_OK")
</pallas_src>

<mosaic_0001>
module attributes {stable_mosaic.version = 11 : i64} {
  func.func @_mlp_kernel(%arg0: i32, %arg1: memref<16x32xf32, #tpu.memory_space<vmem>>, %arg2: memref<32x512xf32, #tpu.memory_space<vmem>>, %arg3: memref<1x512xf32, #tpu.memory_space<vmem>>, %arg4: memref<1x512xf32, #tpu.memory_space<vmem>>, %arg5: memref<1x1xf32, #tpu.memory_space<smem>>, %arg6: memref<16x128xf32, #tpu.memory_space<vmem>>) attributes {dimension_semantics = [#tpu.dimension_semantics<parallel>], iteration_bounds = array<i64: 1>, scalar_prefetch = 0 : i64, scratch_operands = 0 : i64, tpu.core_type = #tpu.core_type<tc>, window_params = [{transform_indices = @transform_0, window_bounds = array<i64: 16, 32>}, {pipeline_mode = #tpu.pipeline_mode<synchronous>, transform_indices = @transform_1, window_bounds = array<i64: 32, 512>}, {pipeline_mode = #tpu.pipeline_mode<synchronous>, transform_indices = @transform_2, window_bounds = array<i64: 1, 512>}, {pipeline_mode = #tpu.pipeline_mode<synchronous>, transform_indices = @transform_3, window_bounds = array<i64: 1, 512>}, {transform_indices = @transform_4, window_bounds = array<i64: 1, 1>}, {transform_indices = @transform_5, window_bounds = array<i64: 16, 128>}]} {
    %c0 = arith.constant 0 : index
    %c0_0 = arith.constant 0 : index
    %0 = vector.load %arg1[%c0, %c0_0] : memref<16x32xf32, #tpu.memory_space<vmem>>, vector<16x32xf32>
    %c0_1 = arith.constant 0 : index
    %c0_2 = arith.constant 0 : index
    %1 = vector.load %arg2[%c0_1, %c0_2] : memref<32x512xf32, #tpu.memory_space<vmem>>, vector<32x512xf32>
    %cst = arith.constant dense<0.000000e+00> : vector<16x512xf32>
    %2 = tpu.matmul %0, %1, %cst {dimension_numbers = #tpu.dot_dimension_numbers<[1], [0], [0], [1], [0, 0, 1, 1], [], []>} : vector<16x32xf32>, vector<32x512xf32>, vector<16x512xf32> -> vector<16x512xf32>
    %c0_3 = arith.constant 0 : index
    %c0_4 = arith.constant 0 : index
    %3 = vector.load %arg3[%c0_3, %c0_4] : memref<1x512xf32, #tpu.memory_space<vmem>>, vector<1x512xf32>
    %4 = vector.broadcast %3 : vector<1x512xf32> to vector<16x512xf32>
    %5 = arith.addf %2, %4 : vector<16x512xf32>
    %cst_5 = arith.constant 0.000000e+00 : f32
    %6 = vector.broadcast %cst_5 : f32 to vector<16x512xf32>
    %7 = arith.maximumf %5, %6 : vector<16x512xf32>
    %c0_6 = arith.constant 0 : index
    %c0_7 = arith.constant 0 : index
    %8 = vector.load %arg4[%c0_6, %c0_7] : memref<1x512xf32, #tpu.memory_space<vmem>>, vector<1x512xf32>
    %9 = vector.broadcast %8 : vector<1x512xf32> to vector<16x512xf32>
    %10 = arith.mulf %7, %9 : vector<16x512xf32>
    %cst_8 = arith.constant dense<0.000000e+00> : vector<16xf32>
    %11 = vector.multi_reduction <add>, %10, %cst_8 [1] : vector<16x512xf32> to vector<16xf32>
    %12 = vector.shape_cast %11 : vector<16xf32> to vector<16x1xf32>
    %c0_9 = arith.constant 0 : index
    %c0_10 = arith.constant 0 : index
    %13 = memref.load %arg5[%c0_9, %c0_10] : memref<1x1xf32, #tpu.memory_space<smem>>
    %14 = vector.broadcast %13 : f32 to vector<16x1xf32>
    %15 = arith.addf %12, %14 : vector<16x1xf32>
    %cst_11 = arith.constant 0.000000e+00 : f32
    %16 = vector.broadcast %cst_11 : f32 to vector<16x1xf32>
    %17 = arith.maximumf %15, %16 : vector<16x1xf32>
    %18 = vector.shape_cast %17 : vector<16x1xf32> to vector<16x1xf32>
    %19 = vector.broadcast %18 : vector<16x1xf32> to vector<16x128xf32>
    %c0_12 = arith.constant 0 : index
    %c0_13 = arith.constant 0 : index
    %20 = vector.load %arg6[%c0_12, %c0_13] : memref<16x128xf32, #tpu.memory_space<vmem>>, vector<16x128xf32>
    tpu.vector_store %arg6[%c0_12, %c0_13], %19 {strides = array<i32>} : memref<16x128xf32, #tpu.memory_space<vmem>>, vector<16x128xf32>,
    return
  }
  func.func @transform_0(%arg0: i32) -> (i32, i32) {
    %c0_i32 = arith.constant 0 : i32
    %c0_i32_0 = arith.constant 0 : i32
    return %arg0, %c0_i32 : i32, i32
  }
  func.func @transform_1(%arg0: i32) -> (i32, i32) {
    %c0_i32 = arith.constant 0 : i32
    %c0_i32_0 = arith.constant 0 : i32
    %c0_i32_1 = arith.constant 0 : i32
    return %c0_i32, %c0_i32_0 : i32, i32
  }
  func.func @transform_2(%arg0: i32) -> (i32, i32) {
    %c0_i32 = arith.constant 0 : i32
    %c0_i32_0 = arith.constant 0 : i32
    %c0_i32_1 = arith.constant 0 : i32
    return %c0_i32, %c0_i32_0 : i32, i32
  }
  func.func @transform_3(%arg0: i32) -> (i32, i32) {
    %c0_i32 = arith.constant 0 : i32
    %c0_i32_0 = arith.constant 0 : i32
    %c0_i32_1 = arith.constant 0 : i32
    return %c0_i32, %c0_i32_0 : i32, i32
  }
  func.func @transform_4(%arg0: i32) -> (i32, i32) {
    %c0_i32 = arith.constant 0 : i32
    %c0_i32_0 = arith.constant 0 : i32
    %c0_i32_1 = arith.constant 0 : i32
    return %c0_i32, %c0_i32_0 : i32, i32
  }
  func.func @transform_5(%arg0: i32) -> (i32, i32) {
    %c0_i32 = arith.constant 0 : i32
    %c0_i32_0 = arith.constant 0 : i32
    return %arg0, %c0_i32 : i32, i32
  }
}

</mosaic_0001>

<llo_original>
// kernel: tpu_custom_call.1
$region0: #{tpu_custom_call.1}
  #allocation0 [shape = 'u32[]', space=smem, size = 0x4, offset = 0x4, fixed_abs, tag = 'smem constant byte address 0x4 - core index']
  #allocation1 [shape = 'u32[144,128]{1,0:T(1,128)}', space=vmem, size = 0x12000, scoped, tag = 'internal scratch']
  #allocation2 [shape = 'f32[1,1]{1,0:T(1,128)S(6)}', space=smem, size = 0x200, scoped, tag = 'scoped memory for tpu_custom_call.1']
  %s0 = inlined_call_operand.hbm [shape: f32[16,32], index: 0, kind: input, shape index: {}]
  %s1 = inlined_call_operand.hbm [shape: f32[32,512], index: 1, kind: input, shape index: {}]
  %s2 = inlined_call_operand.vmem [shape: f32[1,512], index: 2, kind: input, shape index: {}]
  %s3 = inlined_call_operand.vmem [shape: f32[1,512], index: 3, kind: input, shape index: {}]
  %s4 = inlined_call_operand.<no memory space> [shape: f32[1,1], index: 4, kind: input, shape index: {}]
  %s5 = inlined_call_operand.hbm [shape: f32[16,128], index: 5, kind: output, shape index: {}]
  %s6 = sld [smem:[#allocation0]]
  $region38: #{tpu_custom_call.1} parent=0
    _
  %s8 = ssub.s32 1, %s6
  %s9 = scalar_select 0, %s8, %s6
  %10 = sst [smem:[#allocation2]] %s4
  $region1: #{tpu_custom_call.1} parent=0
    #allocation3 [shape = 'u8[8192]{0}', space=vmem, size = 0x2000, scoped, tag = 'input window, operand 0, single buffered']
    #allocation4 [shape = 's32[1]{0}', space=sflag, size = 0x4, scoped, tag = 'scoped memory for tpu_custom_call.1']
    #allocation5 [shape = 's32[1]{0}', space=sflag, size = 0x4, scoped, tag = 'scoped memory for tpu_custom_call.1']
    #allocation6 [shape = 'u8[65536]{0}', space=vmem, size = 0x10000, scoped, tag = 'input window, operand 1, single buffered']
    #allocation7 [shape = 's32[1]{0}', space=sflag, size = 0x4, scoped, tag = 'scoped memory for tpu_custom_call.1']
    #allocation8 [shape = 'u8[8192]{0}', space=vmem, size = 0x2000, scoped, tag = 'output window, operand 0, single buffered']
    %11 = vsyncpa [#allocation4], 0
    %12 = vsyncpa [#allocation7], 0
    %13 = vsyncpa [#allocation5], 0
    // Predicated region
    $region2: #{tpu_custom_call.1} parent=1 // pred_check
      _
    $region3: #{tpu_custom_call.1} parent=1 // pred_check_branch
      %15 = sbr.rel (0) target = $region5
    $region4: #{tpu_custom_call.1} parent=1 // pred_region
      %s17 = ssub.s32 256, 256
      %18 = vsyncadd [#allocation4], %s17
      %s19 = sshll.u32 [#allocation3], 4
      %s20 = int_to_ptr.vmem [resolvable:$true] %s19
      %25 = dma.hbm_to_vmem [thread:$0]  %s0, 256, %s20, [#allocation4], 128, 128, 8
    $region5: #{tpu_custom_call.1} parent=1 // pred_fallthru
      _
    // Predicated region
    $region6: #{tpu_custom_call.1} parent=1 // pred_check
      _
    $region7: #{tpu_custom_call.1} parent=1 // pred_check_branch
      %27 = sbr.rel (0) target = $region9
    $region8: #{tpu_custom_call.1} parent=1 // pred_region
      %s29 = ssub.s32 2048, 2048
      %30 = vsyncadd [#allocation7], %s29
      %s31 = sshll.u32 [#allocation6], 4
      %s32 = int_to_ptr.vmem [resolvable:$true] %s31
      %37 = dma.hbm_to_vmem [thread:$0]  %s1, 2048, %s32, [#allocation7], 512, 512, 32
    $region9: #{tpu_custom_call.1} parent=1 // pred_fallthru
      _
    // Predicated region
    $region10: #{tpu_custom_call.1} parent=1 // pred_check
      _
    $region11: #{tpu_custom_call.1} parent=1 // pred_check_branch
      %39 = sbr.rel (0) target = $region13
    $region12: #{tpu_custom_call.1} parent=1 // pred_region
      _
    $region13: #{tpu_custom_call.1} parent=1 // pred_fallthru
      _
    // Predicated region
    $region14: #{tpu_custom_call.1} parent=1 // pred_check
      _
    $region15: #{tpu_custom_call.1} parent=1 // pred_check_branch
      %41 = sbr.rel (0) target = $region17
    $region16: #{tpu_custom_call.1} parent=1 // pred_region
      _
    $region17: #{tpu_custom_call.1} parent=1 // pred_fallthru
      _
    // Predicated region
    $region18: #{tpu_custom_call.1} parent=1 // pred_check
      _
    $region19: #{tpu_custom_call.1} parent=1 // pred_check_branch
      %43 = sbr.rel (0) target = $region21
    $region20: #{tpu_custom_call.1} parent=1 // pred_region
      _
    $region21: #{tpu_custom_call.1} parent=1 // pred_fallthru
      _
    // Predicated region
    $region22: #{tpu_custom_call.1} parent=1 // pred_check
      _
    $region23: #{tpu_custom_call.1} parent=1 // pred_check_branch
      %45 = sbr.rel (0) target = $region25
    $region24: #{tpu_custom_call.1} parent=1 // pred_region
      %46 = dma.done [#allocation4], 256
    $region25: #{tpu_custom_call.1} parent=1 // pred_fallthru
      _
    // Predicated region
    $region26: #{tpu_custom_call.1} parent=1 // pred_check
      _
    $region27: #{tpu_custom_call.1} parent=1 // pred_check_branch
      %48 = sbr.rel (0) target = $region29
    $region28: #{tpu_custom_call.1} parent=1 // pred_region
      %49 = dma.done [#allocation7], 2048
    $region29: #{tpu_custom_call.1} parent=1 // pred_fallthru
      _
    %v50 = vld [vmem:[#allocation3] sm:$0xff]
    %v51 = vld [vmem:[#allocation3 + $0x8] sm:$0xff]
    %v52 = vld [vmem:[#allocation6] sm:$0xff]
    %v53 = vld [vmem:[#allocation6 + $0x8] sm:$0xff]
    %v54 = vld [vmem:[#allocation6 + $0x10] sm:$0xff]
    %v55 = vld [vmem:[#allocation6 + $0x18] sm:$0xff]
    %v56 = vld [vmem:[#allocation6 + $0x20] sm:$0xff]
    %v57 = vld [vmem:[#allocation6 + $0x28] sm:$0xff]
    %v58 = vld [vmem:[#allocation6 + $0x30] sm:$0xff]
    %v59 = vld [vmem:[#allocation6 + $0x38] sm:$0xff]
    %v60 = vld [vmem:[#allocation6 + $0x40] sm:$0xff]
    %v61 = vld [vmem:[#allocation6 + $0x48] sm:$0xff]
    %v62 = vld [vmem:[#allocation6 + $0x50] sm:$0xff]
    %v63 = vld [vmem:[#allocation6 + $0x58] sm:$0xff]
    %v64 = vld [vmem:[#allocation6 + $0x60] sm:$0xff]
    %v65 = vld [vmem:[#allocation6 + $0x68] sm:$0xff]
    %v66 = vld [vmem:[#allocation6 + $0x70] sm:$0xff]
    %v67 = vld [vmem:[#allocation6 + $0x78] sm:$0xff]
    %v68 = vld [vmem:[%s2] sm:$0xf]
    %v70 = vlaneseq
    %v71 = vshrl.u32 %v70, 7
    %v72 = vsub.s32 0, %v71
    %v73 = vrot.slane %v68, %v72
    %v74 = vlaneseq
    %v75 = vshrl.u32 %v74, 7
    %v76 = vsub.s32 1, %v75
    %v77 = vrot.slane %v68, %v76
    %v78 = vlaneseq
    %v79 = vshrl.u32 %v78, 7
    %v80 = vsub.s32 2, %v79
    %v81 = vrot.slane %v68, %v80
    %v82 = vlaneseq
    %v83 = vshrl.u32 %v82, 7
    %v84 = vsub.s32 3, %v83
    %v85 = vrot.slane %v68, %v84
    %vm90 = vcmask 261120
    %v92 = vsel %vm90, %v50, 0
    %v95 = vsel %vm90, %v51, 0
    %97 = vmatprep.subr.mxu0 %v53
    %98 = vmatpush1.msra.mxu0 %v52
    %99 = vmatprep.subr.mxu0 %v57
    %100 = vmatpush1.msra.mxu0 %v56
    %101 = vmatprep.subr.mxu0 %v61
    %102 = vmatpush1.msra.mxu0 %v60
    %103 = vmatprep.subr.mxu0 %v65
    %104 = vmatpush1.msra.mxu0 %v64
    %105 = vmatprep.subr.mxu0 0.0
    %106 = vmatpush1.msra.mxu0 0.0
    %107 = vmatprep.subr.mxu0 0.0
    %108 = vmatpush1.msra.mxu0 0.0
    %109 = vmatprep.subr.mxu0 0.0
    %110 = vmatpush1.msra.mxu0 0.0
    %111 = vmatprep.subr.mxu0 0.0
    %112 = vmatpush1.msra.mxu0 0.0
    %113 = vmatprep.subr.mxu0 0.0
    %114 = vmatpush1.msra.mxu0 0.0
    %115 = vmatprep.subr.mxu0 0.0
    %116 = vmatpush1.msra.mxu0 0.0
    %117 = vmatprep.subr.mxu0 0.0
    %118 = vmatpush1.msra.mxu0 0.0
    %119 = vmatprep.subr.mxu0 0.0
    %120 = vmatpush1.msra.mxu0 0.0
    %121 = vmatprep.subr.mxu0 0.0
    %122 = vmatpush1.msra.mxu0 0.0
    %123 = vmatprep.subr.mxu0 0.0
    %124 = vmatpush1.msra.mxu0 0.0
    %125 = vmatprep.subr.mxu0 0.0
    %126 = vmatpush1.msra.mxu0 0.0
    %127 = vmatprep.subr.mxu0 0.0
    %128 = vmatpush1.msra.mxu0 0.0
    %129 = vmatprep.subr.mxu0 0.0
    %130 = vmatpush1.msra.mxu0 0.0
    %131 = vmatprep.subr.mxu0 0.0
    %132 = vmatpush1.msra.mxu0 0.0
    %133 = vmatprep.subr.mxu0 0.0
    %134 = vmatpush1.msra.mxu0 0.0
    %135 = vmatprep.subr.mxu0 0.0
    %136 = vmatpush1.msra.mxu0 0.0
    %137 = vmatprep.subr.mxu0 0.0
    %138 = vmatpush1.msra.mxu0 0.0
    %139 = vmatprep.subr.mxu0 0.0
    %140 = vmatpush1.msra.mxu0 0.0
    %141 = vmatprep.subr.mxu0 0.0
    %142 = vmatpush1.msra.mxu0 0.0
    %143 = vmatprep.subr.mxu0 0.0
    %144 = vmatpush1.msra.mxu0 0.0
    %145 = vmatprep.subr.mxu0 0.0
    %146 = vmatpush1.msra.mxu0 0.0
    %147 = vmatprep.subr.mxu0 0.0
    %148 = vmatpush1.msra.mxu0 0.0
    %149 = vmatprep.subr.mxu0 0.0
    %150 = vmatpush1.msra.mxu0 0.0
    %151 = vmatprep.subr.mxu0 0.0
    %152 = vmatpush1.msra.mxu0 0.0
    %153 = vmatprep.subr.mxu0 0.0
    %154 = vmatpush1.msra.mxu0 0.0
    %155 = vmatprep.subr.mxu0 0.0
    %156 = vmatpush1.msra.mxu0 0.0
    %157 = vmatprep.subr.mxu0 0.0
    %158 = vmatpush1.msra.mxu0 0.0
    %159 = vmatprep.subr.mxu0 0.0
    %160 = vmatpush1.msra.mxu0 0.0
    %161 = vmatprep.mubr.f32.mxu0 0.0
    %162 = vmatmul.mubr.f32.gmra.mrb[0].mxu0 %v92
    %v163 = vpop.f32.mrb[0].mxu0
    %v164 = vadd.f32 %v73, %v163
    %v165 = vpop.f32.mrb[0].mxu0
    %v166 = vadd.f32 %v77, %v165
    %167 = vmatprep.mubr.f32.mxu0 0.0
    %168 = vmatmul.mubr.f32.gmra.mrb[0].mxu0 %v95
    %v169 = vpop.f32.mrb[0].mxu0
    %v170 = vadd.f32 %v73, %v169
    %v171 = vpop.f32.mrb[0].mxu0
    %v172 = vadd.f32 %v77, %v171
    %173 = vdwg.mxu0
    %174 = vmatprep.subr.mxu0 %v55
    %175 = vmatpush1.msra.mxu0 %v54
    %176 = vmatprep.subr.mxu0 %v59
    %177 = vmatpush1.msra.mxu0 %v58
    %178 = vmatprep.subr.mxu0 %v63
    %179 = vmatpush1.msra.mxu0 %v62
    %180 = vmatprep.subr.mxu0 %v67
    %181 = vmatpush1.msra.mxu0 %v66
    %182 = vmatprep.subr.mxu0 0.0
    %183 = vmatpush1.msra.mxu0 0.0
    %184 = vmatprep.subr.mxu0 0.0
    %185 = vmatpush1.msra.mxu0 0.0
    %186 = vmatprep.subr.mxu0 0.0
    %187 = vmatpush1.msra.mxu0 0.0
    %188 = vmatprep.subr.mxu0 0.0
    %189 = vmatpush1.msra.mxu0 0.0
    %190 = vmatprep.subr.mxu0 0.0
    %191 = vmatpush1.msra.mxu0 0.0
    %192 = vmatprep.subr.mxu0 0.0
    %193 = vmatpush1.msra.mxu0 0.0
    %194 = vmatprep.subr.mxu0 0.0
    %195 = vmatpush1.msra.mxu0 0.0
    %196 = vmatprep.subr.mxu0 0.0
    %197 = vmatpush1.msra.mxu0 0.0
    %198 = vmatprep.subr.mxu0 0.0
    %199 = vmatpush1.msra.mxu0 0.0
    %200 = vmatprep.subr.mxu0 0.0
    %201 = vmatpush1.msra.mxu0 0.0
    %202 = vmatprep.subr.mxu0 0.0
    %203 = vmatpush1.msra.mxu0 0.0
    %204 = vmatprep.subr.mxu0 0.0
    %205 = vmatpush1.msra.mxu0 0.0
    %206 = vmatprep.subr.mxu0 0.0
    %207 = vmatpush1.msra.mxu0 0.0
    %208 = vmatprep.subr.mxu0 0.0
    %209 = vmatpush1.msra.mxu0 0.0
    %210 = vmatprep.subr.mxu0 0.0
    %211 = vmatpush1.msra.mxu0 0.0
    %212 = vmatprep.subr.mxu0 0.0
    %213 = vmatpush1.msra.mxu0 0.0
    %214 = vmatprep.subr.mxu0 0.0
    %215 = vmatpush1.msra.mxu0 0.0
    %216 = vmatprep.subr.mxu0 0.0
    %217 = vmatpush1.msra.mxu0 0.0
    %218 = vmatprep.subr.mxu0 0.0
    %219 = vmatpush1.msra.mxu0 0.0
    %220 = vmatprep.subr.mxu0 0.0
    %221 = vmatpush1.msra.mxu0 0.0
    %222 = vmatprep.subr.mxu0 0.0
    %223 = vmatpush1.msra.mxu0 0.0
    %224 = vmatprep.subr.mxu0 0.0
    %225 = vmatpush1.msra.mxu0 0.0
    %226 = vmatprep.subr.mxu0 0.0
    %227 = vmatpush1.msra.mxu0 0.0
    %228 = vmatprep.subr.mxu0 0.0
    %229 = vmatpush1.msra.mxu0 0.0
    %230 = vmatprep.subr.mxu0 0.0
    %231 = vmatpush1.msra.mxu0 0.0
    %232 = vmatprep.subr.mxu0 0.0
    %233 = vmatpush1.msra.mxu0 0.0
    %234 = vmatprep.subr.mxu0 0.0
    %235 = vmatpush1.msra.mxu0 0.0
    %236 = vmatprep.subr.mxu0 0.0
    %237 = vmatpush1.msra.mxu0 0.0
    %238 = vmatprep.mubr.f32.mxu0 0.0
    %239 = vmatmul.mubr.f32.gmra.mrb[0].mxu0 %v92
    %v240 = vpop.f32.mrb[0].mxu0
    %v241 = vadd.f32 %v81, %v240
    %v242 = vpop.f32.mrb[0].mxu0
    %v243 = vadd.f32 %v85, %v242
    %244 = vmatprep.mubr.f32.mxu0 0.0
    %245 = vmatmul.mubr.f32.gmra.mrb[0].mxu0 %v95
    %v246 = vpop.f32.mrb[0].mxu0
    %v247 = vadd.f32 %v81, %v246
    %v248 = vpop.f32.mrb[0].mxu0
    %v249 = vadd.f32 %v85, %v248
    %250 = vdwg.mxu0
    %v251 = vmax.f32 %v164, 0.0
    %v252 = vmax.f32 %v166, 0.0
    %v253 = vmax.f32 %v241, 0.0
    %v254 = vmax.f32 %v243, 0.0
    %v255 = vmax.f32 %v170, 0.0
    %v256 = vmax.f32 %v172, 0.0
    %v257 = vmax.f32 %v247, 0.0
    %v258 = vmax.f32 %v249, 0.0
    %v259 = vld [vmem:[%s3] sm:$0xf]
    %v261 = vlaneseq
    %v262 = vshrl.u32 %v261, 7
    %v263 = vsub.s32 0, %v262
    %v264 = vrot.slane %v259, %v263
    %v265 = vlaneseq
    %v266 = vshrl.u32 %v265, 7
    %v267 = vsub.s32 1, %v266
    %v268 = vrot.slane %v259, %v267
    %v269 = vlaneseq
    %v270 = vshrl.u32 %v269, 7
    %v271 = vsub.s32 2, %v270
    %v272 = vrot.slane %v259, %v271
    %v273 = vlaneseq
    %v274 = vshrl.u32 %v273, 7
    %v275 = vsub.s32 3, %v274
    %v276 = vrot.slane %v259, %v275
    %v281 = vmul.f32 %v251, %v264
    %v282 = vmul.f32 %v252, %v268
    %v283 = vmul.f32 %v253, %v272
    %v284 = vmul.f32 %v254, %v276
    %v285 = vmul.f32 %v255, %v264
    %v286 = vmul.f32 %v256, %v268
    %v287 = vmul.f32 %v257, %v272
    %v288 = vmul.f32 %v258, %v276
    %v289 = vadd.f32 %v281, %v282
    %v290 = vadd.f32 %v289, %v283
    %v291 = vadd.f32 %v290, %v284
    %292 = vadd.xlane.f32.xlu0 %v291
    %v293 = vpop.xlane.xlu0 %292
    %v294 = vadd.f32 %v285, %v286
    %v295 = vadd.f32 %v294, %v287
    %v296 = vadd.f32 %v295, %v288
    %297 = vadd.xlane.f32.xlu0 %v296
    %v298 = vpop.xlane.xlu0 %297
    %s299 = sld [smem:[#allocation2]]
    %v300 = vstv %s299
    %v301 = vadd.f32 %v293, %v300
    %v302 = vadd.f32 %v298, %v300
    %v303 = vmax.f32 %v301, 0.0
    %v304 = vmax.f32 %v302, 0.0
    %305 = vst [vmem:[#allocation8] sm:$0xff] %v303
    %306 = vst [vmem:[#allocation8 + $0x8] sm:$0xff] %v304
    // Predicated region
    $region30: #{tpu_custom_call.1} parent=1 // pred_check
      _
    $region31: #{tpu_custom_call.1} parent=1 // pred_check_branch
      %308 = sbr.rel (0) target = $region33
    $region32: #{tpu_custom_call.1} parent=1 // pred_region
      %s310 = ssub.s32 256, 256
      %311 = vsyncadd [#allocation5], %s310
      %s312 = sshll.u32 [#allocation8], 4
      %s313 = int_to_ptr.vmem [resolvable:$true] %s312
      %318 = dma.vmem_to_hbm [thread:$0]  %s313, 256, %s5, [#allocation5], 128, 128, 8
    $region33: #{tpu_custom_call.1} parent=1 // pred_fallthru
      _
    // Predicated region
    $region34: #{tpu_custom_call.1} parent=1 // pred_check
      _
    $region35: #{tpu_custom_call.1} parent=1 // pred_check_branch
      %320 = sbr.rel (0) target = $region37
    $region36: #{tpu_custom_call.1} parent=1 // pred_region
      %321 = dma.done [#allocation5], 256
    $region37: #{tpu_custom_call.1} parent=1 // pred_fallthru
      _
    %322 = vsyncpa [#allocation4], 1
    %323 = vsyncpa [#allocation7], 1
    %324 = vsyncpa [#allocation5], 1

</llo_original>
